<compile_context>
chip_gen: v7x
topology: tpu7x:2x2x1
jax: 0.10.0
libtpu: 0.0.40
codegen_flags: <defaults>
</compile_context>

<pallas_src>
import functools

import jax
import jax.numpy as jnp
from jax.experimental import pallas as pl
from jax.experimental.pallas import tpu as pltpu

_HIDDEN = 10          # fc1 output size (fixed by the PyTorch module)
_HIDDEN_PAD = 128     # lane-padded hidden dim (VMEM only; zeros -> math unchanged)
_SUBLANE = 8


def _round_up(n, m):
    return ((n + m - 1) // m) * m


def _net_kernel(x_ref, w1_ref, b1_ref, w2_ref, b2_ref, o_ref):
    # fc1: (TB, F) @ (F, H_pad) + (1, H_pad), ReLU   (H padded with zeros)
    h = jnp.dot(x_ref[...], w1_ref[...], preferred_element_type=jnp.float32)
    h = jnp.maximum(h + b1_ref[...], 0.0)
    # out: (TB, H_pad) @ (H_pad, A) + (1, A) -- narrow store (A = n_actions)
    y = jnp.dot(h, w2_ref[...], preferred_element_type=jnp.float32)
    o_ref[...] = (y + b2_ref[...]).astype(o_ref.dtype)


def prepare_params(w1, b1, w2, b2):
    """One-time parameter prep (hoisted out of the per-call hot path).

    Takes PyTorch-layout params:
      w1: (10, n_features), b1: (10,), w2: (n_actions, 10), b2: (n_actions,)
    Returns weights transposed to (in, out); only the *hidden* dim is
    zero-padded to 128 (it never leaves VMEM).  The action dim stays narrow
    so the HBM output is exactly (B, n_actions).
    """
    n_features = w1.shape[1]
    n_actions = w2.shape[0]

    w1t = jnp.zeros((n_features, _HIDDEN_PAD), jnp.float32)
    w1t = w1t.at[:, :_HIDDEN].set(jnp.transpose(w1).astype(jnp.float32))
    b1r = jnp.zeros((1, _HIDDEN_PAD), jnp.float32)
    b1r = b1r.at[:, :_HIDDEN].set(b1.astype(jnp.float32))

    w2t = jnp.zeros((_HIDDEN_PAD, n_actions), jnp.float32)
    w2t = w2t.at[:_HIDDEN, :].set(jnp.transpose(w2).astype(jnp.float32))
    b2r = b2.astype(jnp.float32).reshape(1, n_actions)

    return (w1t, b1r, w2t, b2r)


@functools.partial(jax.jit, static_argnames=("max_tile_rows", "core_parallel"))
def net_forward(x, params, max_tile_rows=4096, core_parallel=False):
    """Forward pass of Net using pre-prepared params.

    Args:
      x:      (B, n_features) float32
      params: output of prepare_params
      max_tile_rows: cap on the batch tile (rows per grid step).  4096 keeps
        double-buffered x/out tiles + VMEM-padded intermediates ~12 MiB,
        safe on v5e/v6e/v7x; on v5e/v6e (128 MiB VMEM) it can be pushed to
        8192-16384 for very large replay batches.
      core_parallel: use pltpu.CORE_PARALLEL on the batch axis (v7x cross-TC
        sharding); default False for maximum portability.
    Returns:
      (B, n_actions) float32 action values.
    """
    w1t, b1r, w2t, b2r = params
    B, F = x.shape
    n_actions = w2t.shape[1]

    # Batch tile: multiple of 8 sublanes; <= half the batch (rounded up) so
    # any B > 8 yields >= 2 grid steps (keeps both v7x TensorCores busy),
    # capped by max_tile_rows.  The grid uses cdiv, so a ragged last tile is
    # handled by Pallas edge-block masking -- no jnp.pad copy of x.
    half = _round_up(-(-B // 2), _SUBLANE)
    TB = max(_SUBLANE, min(max_tile_rows, half))
    grid = (pl.cdiv(B, TB),)

    semantics = (pltpu.CORE_PARALLEL,) if core_parallel else ("parallel",)

    out = pl.pallas_call(
        _net_kernel,
        out_shape=jax.ShapeDtypeStruct((B, n_actions), jnp.float32),
        grid=grid,
        in_specs=[
            pl.BlockSpec((TB, F), lambda i: (i, 0)),        # x: streamed per tile
            pl.BlockSpec(w1t.shape, lambda i: (0, 0)),      # weights/biases resident
            pl.BlockSpec(b1r.shape, lambda i: (0, 0)),
            pl.BlockSpec(w2t.shape, lambda i: (0, 0)),
            pl.BlockSpec(b2r.shape, lambda i: (0, 0)),
        ],
        # Narrow output: last dim == full array dim (legal); 42x less HBM
        # writeback than a 128-lane padded output, and no post-call slice.
        out_specs=pl.BlockSpec((TB, n_actions), lambda i: (i, 0)),
        compiler_params=pltpu.CompilerParams(
            dimension_semantics=semantics,
            vmem_limit_bytes=32 * 1024 * 1024,   # lift v5e's 16 MiB scoped default
        ),
    )(x, w1t, b1r, w2t, b2r)

    return out


if __name__ == "__main__":
    n_features = 4     # CartPole-style observation
    n_actions = 3
    batch = 2

    key = jax.random.PRNGKey(0)
    kx, k1, k2 = jax.random.split(key, 3)
    x = jax.random.normal(kx, (batch, n_features), dtype=jnp.float32)

    # PyTorch-layout params: weight ~ N(0, 0.1) as in the module, zero biases.
    w1 = 0.1 * jax.random.normal(k1, (_HIDDEN, n_features), dtype=jnp.float32)
    b1 = jnp.zeros((_HIDDEN,), jnp.float32)
    w2 = 0.1 * jax.random.normal(k2, (n_actions, _HIDDEN), dtype=jnp.float32)
    b2 = jnp.zeros((n_actions,), jnp.float32)

    # One-time prep (outside the hot path).
    params = prepare_params(w1, b1, w2, b2)

    # Small batch (single grid step, ragged edge block smaller than the tile).
    out = jax.block_until_ready(net_forward(x, params))
    ref = jnp.maximum(x @ w1.T + b1, 0.0) @ w2.T + b2
    assert out.shape == (batch, n_actions), out.shape
    assert jnp.allclose(out, ref, atol=1e-5, rtol=1e-5)

    # Larger ragged batch (multi-step grid + masked last tile).
    xb = jax.random.normal(kx, (2053, n_features), dtype=jnp.float32)
    outb = jax.block_until_ready(net_forward(xb, params))
    refb = jnp.maximum(xb @ w1.T + b1, 0.0) @ w2.T + b2
    assert outb.shape == (2053, n_actions), outb.shape
    assert jnp.allclose(outb, refb, atol=1e-5, rtol=1e-5)

    print("KERNEL_OK")
</pallas_src>

<mosaic_0001>
module attributes {stable_mosaic.version = 11 : i64} {
  func.func @_net_kernel(%arg0: i32, %arg1: memref<8x4xf32, #tpu.memory_space<vmem>>, %arg2: memref<4x128xf32, #tpu.memory_space<vmem>>, %arg3: memref<1x128xf32, #tpu.memory_space<vmem>>, %arg4: memref<128x3xf32, #tpu.memory_space<vmem>>, %arg5: memref<1x3xf32, #tpu.memory_space<vmem>>, %arg6: memref<8x3xf32, #tpu.memory_space<vmem>>) attributes {dimension_semantics = [#tpu.dimension_semantics<parallel>], iteration_bounds = array<i64: 1>, scalar_prefetch = 0 : i64, scratch_operands = 0 : i64, tpu.core_type = #tpu.core_type<tc>, window_params = [{transform_indices = @transform_0, window_bounds = array<i64: 8, 4>}, {pipeline_mode = #tpu.pipeline_mode<synchronous>, transform_indices = @transform_1, window_bounds = array<i64: 4, 128>}, {pipeline_mode = #tpu.pipeline_mode<synchronous>, transform_indices = @transform_2, window_bounds = array<i64: 1, 128>}, {pipeline_mode = #tpu.pipeline_mode<synchronous>, transform_indices = @transform_3, window_bounds = array<i64: 128, 3>}, {pipeline_mode = #tpu.pipeline_mode<synchronous>, transform_indices = @transform_4, window_bounds = array<i64: 1, 3>}, {transform_indices = @transform_5, window_bounds = array<i64: 8, 3>}]} {
    %c0 = arith.constant 0 : index
    %c0_0 = arith.constant 0 : index
    %0 = vector.load %arg1[%c0, %c0_0] : memref<8x4xf32, #tpu.memory_space<vmem>>, vector<8x4xf32>
    %c0_1 = arith.constant 0 : index
    %c0_2 = arith.constant 0 : index
    %1 = vector.load %arg2[%c0_1, %c0_2] : memref<4x128xf32, #tpu.memory_space<vmem>>, vector<4x128xf32>
    %cst = arith.constant dense<0.000000e+00> : vector<8x128xf32>
    %2 = tpu.matmul %0, %1, %cst {dimension_numbers = #tpu.dot_dimension_numbers<[1], [0], [0], [1], [0, 0, 1, 1], [], []>} : vector<8x4xf32>, vector<4x128xf32>, vector<8x128xf32> -> vector<8x128xf32>
    %c0_3 = arith.constant 0 : index
    %c0_4 = arith.constant 0 : index
    %3 = vector.load %arg3[%c0_3, %c0_4] : memref<1x128xf32, #tpu.memory_space<vmem>>, vector<1x128xf32>
    %4 = vector.broadcast %3 : vector<1x128xf32> to vector<8x128xf32>
    %5 = arith.addf %2, %4 : vector<8x128xf32>
    %cst_5 = arith.constant 0.000000e+00 : f32
    %6 = vector.broadcast %cst_5 : f32 to vector<8x128xf32>
    %7 = arith.maximumf %5, %6 : vector<8x128xf32>
    %c0_6 = arith.constant 0 : index
    %c0_7 = arith.constant 0 : index
    %8 = vector.load %arg4[%c0_6, %c0_7] : memref<128x3xf32, #tpu.memory_space<vmem>>, vector<128x3xf32>
    %cst_8 = arith.constant dense<0.000000e+00> : vector<8x3xf32>
    %9 = tpu.matmul %7, %8, %cst_8 {dimension_numbers = #tpu.dot_dimension_numbers<[1], [0], [0], [1], [0, 0, 1, 1], [], []>} : vector<8x128xf32>, vector<128x3xf32>, vector<8x3xf32> -> vector<8x3xf32>
    %c0_9 = arith.constant 0 : index
    %c0_10 = arith.constant 0 : index
    %10 = vector.load %arg5[%c0_9, %c0_10] : memref<1x3xf32, #tpu.memory_space<vmem>>, vector<1x3xf32>
    %11 = vector.broadcast %10 : vector<1x3xf32> to vector<8x3xf32>
    %12 = arith.addf %9, %11 : vector<8x3xf32>
    %c0_11 = arith.constant 0 : index
    %c0_12 = arith.constant 0 : index
    %13 = vector.load %arg6[%c0_11, %c0_12] : memref<8x3xf32, #tpu.memory_space<vmem>>, vector<8x3xf32>
    tpu.vector_store %arg6[%c0_11, %c0_12], %12 {strides = array<i32>} : memref<8x3xf32, #tpu.memory_space<vmem>>, vector<8x3xf32>,
    return
  }
  func.func @transform_0(%arg0: i32) -> (i32, i32) {
    %c0_i32 = arith.constant 0 : i32
    %c0_i32_0 = arith.constant 0 : i32
    return %arg0, %c0_i32 : i32, i32
  }
  func.func @transform_1(%arg0: i32) -> (i32, i32) {
    %c0_i32 = arith.constant 0 : i32
    %c0_i32_0 = arith.constant 0 : i32
    %c0_i32_1 = arith.constant 0 : i32
    return %c0_i32, %c0_i32_0 : i32, i32
  }
  func.func @transform_2(%arg0: i32) -> (i32, i32) {
    %c0_i32 = arith.constant 0 : i32
    %c0_i32_0 = arith.constant 0 : i32
    %c0_i32_1 = arith.constant 0 : i32
    return %c0_i32, %c0_i32_0 : i32, i32
  }
  func.func @transform_3(%arg0: i32) -> (i32, i32) {
    %c0_i32 = arith.constant 0 : i32
    %c0_i32_0 = arith.constant 0 : i32
    %c0_i32_1 = arith.constant 0 : i32
    return %c0_i32, %c0_i32_0 : i32, i32
  }
  func.func @transform_4(%arg0: i32) -> (i32, i32) {
    %c0_i32 = arith.constant 0 : i32
    %c0_i32_0 = arith.constant 0 : i32
    %c0_i32_1 = arith.constant 0 : i32
    return %c0_i32, %c0_i32_0 : i32, i32
  }
  func.func @transform_5(%arg0: i32) -> (i32, i32) {
    %c0_i32 = arith.constant 0 : i32
    %c0_i32_0 = arith.constant 0 : i32
    return %arg0, %c0_i32 : i32, i32
  }
}

</mosaic_0001>

<llo_original>
// kernel: net_forward.1
$region0: #{net_forward.1}
  #allocation0 [shape = 'u32[]', space=smem, size = 0x4, offset = 0x4, fixed_abs, tag = 'smem constant byte address 0x4 - core index']
  #allocation1 [shape = 'u32[144,128]{1,0:T(1,128)}', space=vmem, size = 0x12000, scoped, tag = 'internal scratch']
  %s0 = inlined_call_operand.vmem [shape: f32[2,4], index: 0, kind: input, shape index: {}]
  %s1 = inlined_call_operand.vmem [shape: f32[4,128], index: 1, kind: input, shape index: {}]
  %s2 = inlined_call_operand.vmem [shape: f32[1,128], index: 2, kind: input, shape index: {}]
  %s3 = inlined_call_operand.vmem [shape: f32[128,3], index: 3, kind: input, shape index: {}]
  %s4 = inlined_call_operand.vmem [shape: f32[1,3], index: 4, kind: input, shape index: {}]
  %s5 = inlined_call_operand.hbm [shape: f32[2,3], index: 5, kind: output, shape index: {}]
  %s6 = sld [smem:[#allocation0]]
  $region30: #{net_forward.1} parent=0
    _
  %s8 = ssub.s32 1, %s6
  %s9 = scalar_select 0, %s8, %s6
  $region1: #{net_forward.1} parent=0
    #allocation2 [shape = 'u8[4096]{0}', space=vmem, size = 0x1000, scoped, tag = 'output window, operand 0, single buffered']
    #allocation3 [shape = 's32[1]{0}', space=sflag, size = 0x4, scoped, tag = 'scoped memory for net_forward.1']
    %10 = vsyncpa [#allocation3], 0
    // Predicated region
    $region2: #{net_forward.1} parent=1 // pred_check
      _
    $region3: #{net_forward.1} parent=1 // pred_check_branch
      %12 = sbr.rel (0) target = $region5
    $region4: #{net_forward.1} parent=1 // pred_region
      _
    $region5: #{net_forward.1} parent=1 // pred_fallthru
      _
    // Predicated region
    $region6: #{net_forward.1} parent=1 // pred_check
      _
    $region7: #{net_forward.1} parent=1 // pred_check_branch
      %14 = sbr.rel (0) target = $region9
    $region8: #{net_forward.1} parent=1 // pred_region
      _
    $region9: #{net_forward.1} parent=1 // pred_fallthru
      _
    // Predicated region
    $region10: #{net_forward.1} parent=1 // pred_check
      _
    $region11: #{net_forward.1} parent=1 // pred_check_branch
      %16 = sbr.rel (0) target = $region13
    $region12: #{net_forward.1} parent=1 // pred_region
      _
    $region13: #{net_forward.1} parent=1 // pred_fallthru
      _
    // Predicated region
    $region14: #{net_forward.1} parent=1 // pred_check
      _
    $region15: #{net_forward.1} parent=1 // pred_check_branch
      %18 = sbr.rel (0) target = $region17
    $region16: #{net_forward.1} parent=1 // pred_region
      _
    $region17: #{net_forward.1} parent=1 // pred_fallthru
      _
    // Predicated region
    $region18: #{net_forward.1} parent=1 // pred_check
      _
    $region19: #{net_forward.1} parent=1 // pred_check_branch
      %20 = sbr.rel (0) target = $region21
    $region20: #{net_forward.1} parent=1 // pred_region
      _
    $region21: #{net_forward.1} parent=1 // pred_fallthru
      _
    %v21 = vld [vmem:[%s0] sm:$0xff]
    %v22 = vld [vmem:[%s1] sm:$0xf]
    %v23 = vld [vmem:[%s2] sm:$0x1]
    %v25 = vlaneseq
    %v26 = vshrl.u32 %v25, 7
    %v27 = vsub.s32 0, %v26
    %v28 = vrot.slane %v23, %v27
    %vm30 = vcmask 31744
    %v32 = vsel %vm30, %v21, 0
    %vm34 = vcmask 1043456
    %v36 = vsel %vm34, %v22, 0
    %38 = vmatprep.subr.mxu0 0.0
    %39 = vmatpush1.msra.mxu0 %v36
    %40 = vmatprep.subr.mxu0 0.0
    %41 = vmatpush1.msra.mxu0 0.0
    %42 = vmatprep.subr.mxu0 0.0
    %43 = vmatpush1.msra.mxu0 0.0
    %44 = vmatprep.subr.mxu0 0.0
    %45 = vmatpush1.msra.mxu0 0.0
    %46 = vmatprep.subr.mxu0 0.0
    %47 = vmatpush1.msra.mxu0 0.0
    %48 = vmatprep.subr.mxu0 0.0
    %49 = vmatpush1.msra.mxu0 0.0
    %50 = vmatprep.subr.mxu0 0.0
    %51 = vmatpush1.msra.mxu0 0.0
    %52 = vmatprep.subr.mxu0 0.0
    %53 = vmatpush1.msra.mxu0 0.0
    %54 = vmatprep.subr.mxu0 0.0
    %55 = vmatpush1.msra.mxu0 0.0
    %56 = vmatprep.subr.mxu0 0.0
    %57 = vmatpush1.msra.mxu0 0.0
    %58 = vmatprep.subr.mxu0 0.0
    %59 = vmatpush1.msra.mxu0 0.0
    %60 = vmatprep.subr.mxu0 0.0
    %61 = vmatpush1.msra.mxu0 0.0
    %62 = vmatprep.subr.mxu0 0.0
    %63 = vmatpush1.msra.mxu0 0.0
    %64 = vmatprep.subr.mxu0 0.0
    %65 = vmatpush1.msra.mxu0 0.0
    %66 = vmatprep.subr.mxu0 0.0
    %67 = vmatpush1.msra.mxu0 0.0
    %68 = vmatprep.subr.mxu0 0.0
    %69 = vmatpush1.msra.mxu0 0.0
    %70 = vmatprep.subr.mxu0 0.0
    %71 = vmatpush1.msra.mxu0 0.0
    %72 = vmatprep.subr.mxu0 0.0
    %73 = vmatpush1.msra.mxu0 0.0
    %74 = vmatprep.subr.mxu0 0.0
    %75 = vmatpush1.msra.mxu0 0.0
    %76 = vmatprep.subr.mxu0 0.0
    %77 = vmatpush1.msra.mxu0 0.0
    %78 = vmatprep.subr.mxu0 0.0
    %79 = vmatpush1.msra.mxu0 0.0
    %80 = vmatprep.subr.mxu0 0.0
    %81 = vmatpush1.msra.mxu0 0.0
    %82 = vmatprep.subr.mxu0 0.0
    %83 = vmatpush1.msra.mxu0 0.0
    %84 = vmatprep.subr.mxu0 0.0
    %85 = vmatpush1.msra.mxu0 0.0
    %86 = vmatprep.subr.mxu0 0.0
    %87 = vmatpush1.msra.mxu0 0.0
    %88 = vmatprep.subr.mxu0 0.0
    %89 = vmatpush1.msra.mxu0 0.0
    %90 = vmatprep.subr.mxu0 0.0
    %91 = vmatpush1.msra.mxu0 0.0
    %92 = vmatprep.subr.mxu0 0.0
    %93 = vmatpush1.msra.mxu0 0.0
    %94 = vmatprep.subr.mxu0 0.0
    %95 = vmatpush1.msra.mxu0 0.0
    %96 = vmatprep.subr.mxu0 0.0
    %97 = vmatpush1.msra.mxu0 0.0
    %98 = vmatprep.subr.mxu0 0.0
    %99 = vmatpush1.msra.mxu0 0.0
    %100 = vmatprep.subr.mxu0 0.0
    %101 = vmatpush1.msra.mxu0 0.0
    %102 = vmatprep.mubr.f32.mxu0 0.0
    %103 = vmatmul.mubr.f32.gmra.mrb[0].mxu0 %v32
    %v104 = vpop.f32.mrb[0].mxu0
    %v105 = vadd.f32 %v28, %v104
    %v106 = vpop.f32.mrb[0].mxu0
    %107 = vdwg.mxu0
    %v108 = vmax.f32 %v105, 0.0
    %v109 = vld [vmem:[%s3] sm:$0xff]
    %v110 = vld [vmem:[%s3 + $0x8] sm:$0xff]
    %v111 = vld [vmem:[%s3 + $0x10] sm:$0xff]
    %v112 = vld [vmem:[%s3 + $0x18] sm:$0xff]
    %v113 = vld [vmem:[%s3 + $0x20] sm:$0xff]
    %v114 = vld [vmem:[%s3 + $0x28] sm:$0xff]
    %v115 = vld [vmem:[%s3 + $0x30] sm:$0xff]
    %v116 = vld [vmem:[%s3 + $0x38] sm:$0xff]
    %v117 = vld [vmem:[%s3 + $0x40] sm:$0xff]
    %v118 = vld [vmem:[%s3 + $0x48] sm:$0xff]
    %v119 = vld [vmem:[%s3 + $0x50] sm:$0xff]
    %v120 = vld [vmem:[%s3 + $0x58] sm:$0xff]
    %v121 = vld [vmem:[%s3 + $0x60] sm:$0xff]
    %v122 = vld [vmem:[%s3 + $0x68] sm:$0xff]
    %v123 = vld [vmem:[%s3 + $0x70] sm:$0xff]
    %v124 = vld [vmem:[%s3 + $0x78] sm:$0xff]
    %v125 = vld [vmem:[%s4] sm:$0x1]
    %v127 = vlaneseq
    %v128 = vshrl.u32 %v127, 7
    %v129 = vsub.s32 0, %v128
    %v130 = vrot.slane %v125, %v129
    %132 = vmatprep.subr.mxu0 0.0
    %133 = vmatpush1.msra.mxu0 %v109
    %134 = vmatprep.subr.mxu0 0.0
    %135 = vmatpush1.msra.mxu0 %v110
    %136 = vmatprep.subr.mxu0 0.0
    %137 = vmatpush1.msra.mxu0 %v111
    %138 = vmatprep.subr.mxu0 0.0
    %139 = vmatpush1.msra.mxu0 %v112
    %140 = vmatprep.subr.mxu0 0.0
    %141 = vmatpush1.msra.mxu0 %v113
    %142 = vmatprep.subr.mxu0 0.0
    %143 = vmatpush1.msra.mxu0 %v114
    %144 = vmatprep.subr.mxu0 0.0
    %145 = vmatpush1.msra.mxu0 %v115
    %146 = vmatprep.subr.mxu0 0.0
    %147 = vmatpush1.msra.mxu0 %v116
    %148 = vmatprep.subr.mxu0 0.0
    %149 = vmatpush1.msra.mxu0 %v117
    %150 = vmatprep.subr.mxu0 0.0
    %151 = vmatpush1.msra.mxu0 %v118
    %152 = vmatprep.subr.mxu0 0.0
    %153 = vmatpush1.msra.mxu0 %v119
    %154 = vmatprep.subr.mxu0 0.0
    %155 = vmatpush1.msra.mxu0 %v120
    %156 = vmatprep.subr.mxu0 0.0
    %157 = vmatpush1.msra.mxu0 %v121
    %158 = vmatprep.subr.mxu0 0.0
    %159 = vmatpush1.msra.mxu0 %v122
    %160 = vmatprep.subr.mxu0 0.0
    %161 = vmatpush1.msra.mxu0 %v123
    %162 = vmatprep.subr.mxu0 0.0
    %163 = vmatpush1.msra.mxu0 %v124
    %164 = vmatprep.subr.mxu0 0.0
    %165 = vmatpush1.msra.mxu0 0.0
    %166 = vmatprep.subr.mxu0 0.0
    %167 = vmatpush1.msra.mxu0 0.0
    %168 = vmatprep.subr.mxu0 0.0
    %169 = vmatpush1.msra.mxu0 0.0
    %170 = vmatprep.subr.mxu0 0.0
    %171 = vmatpush1.msra.mxu0 0.0
    %172 = vmatprep.subr.mxu0 0.0
    %173 = vmatpush1.msra.mxu0 0.0
    %174 = vmatprep.subr.mxu0 0.0
    %175 = vmatpush1.msra.mxu0 0.0
    %176 = vmatprep.subr.mxu0 0.0
    %177 = vmatpush1.msra.mxu0 0.0
    %178 = vmatprep.subr.mxu0 0.0
    %179 = vmatpush1.msra.mxu0 0.0
    %180 = vmatprep.subr.mxu0 0.0
    %181 = vmatpush1.msra.mxu0 0.0
    %182 = vmatprep.subr.mxu0 0.0
    %183 = vmatpush1.msra.mxu0 0.0
    %184 = vmatprep.subr.mxu0 0.0
    %185 = vmatpush1.msra.mxu0 0.0
    %186 = vmatprep.subr.mxu0 0.0
    %187 = vmatpush1.msra.mxu0 0.0
    %188 = vmatprep.subr.mxu0 0.0
    %189 = vmatpush1.msra.mxu0 0.0
    %190 = vmatprep.subr.mxu0 0.0
    %191 = vmatpush1.msra.mxu0 0.0
    %192 = vmatprep.subr.mxu0 0.0
    %193 = vmatpush1.msra.mxu0 0.0
    %194 = vmatprep.subr.mxu0 0.0
    %195 = vmatpush1.msra.mxu0 0.0
    %196 = vmatprep.mubr.f32.mxu0 0.0
    %197 = vmatmul.mubr.f32.gmra.mrb[0].mxu0 %v108
    %v198 = vpop.f32.mrb[0].mxu0
    %v199 = vadd.f32 %v130, %v198
    %v200 = vpop.f32.mrb[0].mxu0
    %201 = vdwg.mxu0
    %vm202 = vcmask 23552
    %203 = vst.msk [vmem:[#allocation2] sm:$0xff] %vm202, %v199
    // Predicated region
    $region22: #{net_forward.1} parent=1 // pred_check
      _
    $region23: #{net_forward.1} parent=1 // pred_check_branch
      %205 = sbr.rel (0) target = $region25
    $region24: #{net_forward.1} parent=1 // pred_region
      %s207 = ssub.s32 128, 32
      %208 = vsyncadd [#allocation3], %s207
      %s209 = sshll.u32 [#allocation2], 4
      %s210 = int_to_ptr.vmem [resolvable:$true] %s209
      %215 = dma.vmem_to_hbm [thread:$0]  %s210, 32, %s5, [#allocation3], 32, 32, 2
    $region25: #{net_forward.1} parent=1 // pred_fallthru
      _
    // Predicated region
    $region26: #{net_forward.1} parent=1 // pred_check
      _
    $region27: #{net_forward.1} parent=1 // pred_check_branch
      %217 = sbr.rel (0) target = $region29
    $region28: #{net_forward.1} parent=1 // pred_region
      %218 = dma.done [#allocation3], 128
    $region29: #{net_forward.1} parent=1 // pred_fallthru
      _
    %219 = vsyncpa [#allocation3], 1

</llo_original>
